<compile_context>
chip_gen: v5e
topology: v5e:2x2
jax: 0.10.0
libtpu: 0.0.40
codegen_flags: <defaults>
</compile_context>

<pallas_src>
import functools

import jax
import jax.numpy as jnp
from jax.experimental import pallas as pl
from jax.experimental.pallas import tpu as pltpu


def _round_up(x, m):
    return (x + m - 1) // m * m


def _triplet_cosent_kernel(emb_ref, xscale_ref, spos_ref, neg_ref, invn_ref,
                           out_ref, m_ref, s_ref, *, mask_cols, batch_cols):
    """Grid = (row_blocks, col_blocks); col axis is an online-LSE reduction.

    NOTE: pl.program_id is only read at the top level of the kernel body
    (never inside a pl.when body) -- required for the interpret path.
    """
    j = pl.program_id(1)
    last_j = pl.num_programs(1) - 1
    tn = neg_ref.shape[0]

    # ---- per-row-block init of the online logsumexp state ----
    # Column 0 of sim_matrix_diff is identically 0, so start with running
    # max m = 0 and running sum s = exp(0 - 0) = 1.
    @pl.when(j == 0)
    def _():
        m_ref[...] = jnp.zeros_like(m_ref)
        s_ref[...] = jnp.ones_like(s_ref)

    # ---- negative tile: raw dot products on the MXU, native input dtype,
    #      contraction on the last dim of both operands (no neg.T) ----
    dots = jax.lax.dot_general(
        emb_ref[...], neg_ref[...], (((1,), (1,)), ((), ())),
        preferred_element_type=jnp.float32)                         # (TM, TN)

    # diff = (cos(emb, neg) - cos(emb, pos)) / T
    # xscale = 1/(T*||emb||) (TM,1), invn = 1/||neg|| (1,TN), spos = sim_pos/T.
    diff = dots * xscale_ref[...] * invn_ref[...] - spos_ref[...]   # (TM, TN)

    # Static padding mask: only emitted when the neg batch is not a multiple
    # of the column tile (trace-time Python condition).
    if mask_cols:
        col = j * tn + jax.lax.broadcasted_iota(jnp.int32, diff.shape, 1)
        diff = jnp.where(col < batch_cols, diff, -jnp.inf)

    # ---- online logsumexp update ----
    m_prev = m_ref[...]
    m_new = jnp.maximum(m_prev, jnp.max(diff, axis=-1, keepdims=True))
    s_ref[...] = (s_ref[...] * jnp.exp(m_prev - m_new)
                  + jnp.sum(jnp.exp(diff - m_new), axis=-1, keepdims=True))
    m_ref[...] = m_new

    # ---- per-row-block epilogue: store per-row logsumexp ----
    @pl.when(j == last_j)
    def _():
        out_ref[...] = m_ref[...] + jnp.log(s_ref[...])


def triplet_in_batch_neg_cosent_loss(emb, pos, neg, *, temperature=0.05,
                                     margin=0.0, add_swap_loss=False,
                                     block_m=256, block_n=512,
                                     compute_dtype=None):
    """Pallas implementation of TripletInBatchNegCoSentLoss.forward.

    emb, pos: (batch, embedding_dim); neg: (neg_batch, embedding_dim).
    Returns a scalar float32 loss.
    """
    del margin  # stored by the module but unused in this forward
    assert not add_swap_loss, "add_swap_loss=True not implemented"
    assert emb.ndim == 2 and emb.shape == pos.shape
    assert neg.ndim == 2 and neg.shape[1] == emb.shape[1]

    B, D = emb.shape
    Bn = neg.shape[0]
    inv_temp = float(1.0 / temperature)

    # ---- O(B*D) precomputes hoisted out of the streamed kernel (f32) ----
    emb32 = emb.astype(jnp.float32)
    pos32 = pos.astype(jnp.float32)
    neg32 = neg.astype(jnp.float32)
    x_norm = jnp.sqrt(jnp.sum(emb32 * emb32, axis=-1, keepdims=True))   # (B, 1)
    p_norm = jnp.sqrt(jnp.sum(pos32 * pos32, axis=-1, keepdims=True))   # (B, 1)
    n_norm = jnp.sqrt(jnp.sum(neg32 * neg32, axis=-1, keepdims=True))   # (Bn,1)
    # Positive cosine with torch eps semantics (product clamped at 1e-8),
    # already scaled by 1/T.
    spos = (jnp.sum(emb32 * pos32, axis=-1, keepdims=True)
            / jnp.maximum(x_norm * p_norm, 1e-8)) * inv_temp            # (B, 1)
    # NOTE: neg-cosine eps is applied per-norm (1e-4 ~ sqrt(1e-8)) instead of
    # on the norm product; identical for non-degenerate rows.
    xscale = inv_temp / jnp.maximum(x_norm, 1e-4)                        # (B, 1)
    inv_n = (1.0 / jnp.maximum(n_norm, 1e-4)).reshape(1, Bn)             # (1, Bn)

    # ---- tile sizing ----
    mxu_dtype = emb.dtype if compute_dtype is None else compute_dtype
    itemsize = jnp.dtype(mxu_dtype).itemsize
    sub = max(8, 32 // itemsize)          # native sublane pack: 8/16/32 for f32/bf16/int8
    tm = min(block_m, _round_up(B, sub))
    tn = min(block_n, _round_up(Bn, 128))
    # Keep >= 2 row blocks when the batch allows it so both v7x TCs get work.
    if B <= block_m and tm >= 2 * max(sub, 128):
        tm = _round_up(tm // 2, sub)
    bm = _round_up(B, tm)
    bn = _round_up(Bn, tn)
    mask_cols = bn != Bn

    def pad_rows(x, rows):
        return x if x.shape[0] == rows else jnp.pad(x, ((0, rows - x.shape[0]), (0, 0)))

    emb_in = emb if compute_dtype is None else emb.astype(compute_dtype)
    neg_in = neg if compute_dtype is None else neg.astype(compute_dtype)
    emb_p = pad_rows(emb_in, bm)
    neg_p = pad_rows(neg_in, bn)
    xscale_p = pad_rows(xscale, bm)
    spos_p = pad_rows(spos, bm)
    inv_n_p = inv_n if bn == Bn else jnp.pad(inv_n, ((0, 0), (0, bn - Bn)))

    # Explicit VMEM budget: double-buffered streamed tiles + f32 body
    # intermediates, capped below v7x's 64 MiB physical VMEM per TensorCore.
    in_bytes = 2 * (tm * D + tn * D) * itemsize
    body_bytes = 4 * tm * tn * 4 + 8 * (tm + tn) * 4
    vmem_limit = int(min(56 * 1024 * 1024,
                         max(32 * 1024 * 1024,
                             in_bytes + body_bytes + 8 * 1024 * 1024)))

    kernel = functools.partial(_triplet_cosent_kernel,
                               mask_cols=mask_cols, batch_cols=Bn)

    lse = pl.pallas_call(
        kernel,
        out_shape=jax.ShapeDtypeStruct((bm, 1), jnp.float32),
        grid_spec=pltpu.PrefetchScalarGridSpec(
            num_scalar_prefetch=0,
            grid=(bm // tm, bn // tn),
            in_specs=[
                pl.BlockSpec((tm, D), lambda i, j: (i, 0)),   # emb (held over j)
                pl.BlockSpec((tm, 1), lambda i, j: (i, 0)),   # 1/(T*||emb||)
                pl.BlockSpec((tm, 1), lambda i, j: (i, 0)),   # sim_pos / T
                pl.BlockSpec((tn, D), lambda i, j: (j, 0)),   # neg (streamed)
                pl.BlockSpec((1, tn), lambda i, j: (0, j)),   # 1/||neg||
            ],
            out_specs=pl.BlockSpec((tm, 1), lambda i, j: (i, 0)),
            scratch_shapes=[
                pltpu.VMEM((tm, 1), jnp.float32),   # running max m
                pltpu.VMEM((tm, 1), jnp.float32),   # running sum s
            ]),
        compiler_params=pltpu.CompilerParams(
            dimension_semantics=("parallel", "arbitrary"),
            vmem_limit_bytes=vmem_limit),
    )(emb_p, xscale_p, spos_p, neg_p, inv_n_p)

    # Padded rows are simply dropped here (no in-kernel row mask needed).
    return jnp.sum(lse[:B, 0]) / B


def _reference_loss(emb, pos, neg, temperature=0.05):
    # Pure-JAX reference mirroring the PyTorch forward (sanity check only).
    eps = 1e-8

    def cos(a, b):
        num = jnp.sum(a * b, axis=-1)
        den = jnp.maximum(
            jnp.linalg.norm(a, axis=-1) * jnp.linalg.norm(b, axis=-1), eps)
        return num / den

    sim_pos = cos(emb, pos)                                   # (B,)
    sim_neg = cos(emb[:, None, :], neg[None, :, :])           # (B, Bn)
    sim = jnp.concatenate([sim_pos[:, None], sim_neg], axis=1) / temperature
    diff = sim - sim[:, :1]
    return jnp.mean(jax.scipy.special.logsumexp(diff, axis=1))


if __name__ == "__main__":
    key = jax.random.PRNGKey(0)
    k1, k2, k3, k4, k5, k6 = jax.random.split(key, 6)

    # Case 1: tiny shapes (single tile, padded negative columns).
    B, D = 8, 32
    emb = jax.random.normal(k1, (B, D), dtype=jnp.float32)
    pos = jax.random.normal(k2, (B, D), dtype=jnp.float32)
    neg = jax.random.normal(k3, (B, D), dtype=jnp.float32)
    loss = jax.block_until_ready(
        triplet_in_batch_neg_cosent_loss(emb, pos, neg, temperature=0.05))
    ref = jax.block_until_ready(_reference_loss(emb, pos, neg, 0.05))
    assert jnp.allclose(loss, ref, rtol=1e-4, atol=1e-4), (loss, ref)

    # Case 2: several negative-column tiles (exercises the online logsumexp
    # across the "arbitrary" grid axis plus column padding on the last tile).
    B2, Bn2, D2 = 24, 300, 64
    emb2 = jax.random.normal(k4, (B2, D2), dtype=jnp.float32)
    pos2 = jax.random.normal(k5, (B2, D2), dtype=jnp.float32)
    neg2 = jax.random.normal(k6, (Bn2, D2), dtype=jnp.float32)
    loss2 = jax.block_until_ready(
        triplet_in_batch_neg_cosent_loss(emb2, pos2, neg2, temperature=0.05,
                                         block_n=128))
    ref2 = jax.block_until_ready(_reference_loss(emb2, pos2, neg2, 0.05))
    assert jnp.allclose(loss2, ref2, rtol=1e-4, atol=1e-4), (loss2, ref2)

    print("KERNEL_OK")
</pallas_src>

<mosaic_0001>
module attributes {stable_mosaic.version = 11 : i64} {
  func.func @_triplet_cosent_kernel(%arg0: i32, %arg1: i32, %arg2: memref<8x32xf32, #tpu.memory_space<vmem>>, %arg3: memref<8x1xf32, #tpu.memory_space<vmem>>, %arg4: memref<8x1xf32, #tpu.memory_space<vmem>>, %arg5: memref<128x32xf32, #tpu.memory_space<vmem>>, %arg6: memref<1x128xf32, #tpu.memory_space<vmem>>, %arg7: memref<8x1xf32, #tpu.memory_space<vmem>>, %arg8: memref<8x1xf32, #tpu.memory_space<vmem>>, %arg9: memref<8x1xf32, #tpu.memory_space<vmem>>) attributes {dimension_semantics = [#tpu.dimension_semantics<parallel>, #tpu.dimension_semantics<arbitrary>], iteration_bounds = array<i64: 1, 1>, scalar_prefetch = 0 : i64, scratch_operands = 2 : i64, tpu.core_type = #tpu.core_type<tc>, window_params = [{transform_indices = @transform_0, window_bounds = array<i64: 8, 32>}, {transform_indices = @transform_1, window_bounds = array<i64: 8, 1>}, {transform_indices = @transform_2, window_bounds = array<i64: 8, 1>}, {transform_indices = @transform_3, window_bounds = array<i64: 128, 32>}, {transform_indices = @transform_4, window_bounds = array<i64: 1, 128>}, {transform_indices = @transform_5, window_bounds = array<i64: 8, 1>}]} {
    %c0_i32 = arith.constant 0 : i32
    %0 = arith.cmpi eq, %arg1, %c0_i32 : i32
    %1 = arith.extui %0 : i1 to i32
    %c0_i32_0 = arith.constant 0 : i32
    %2 = arith.cmpi ne, %1, %c0_i32_0 : i32
    scf.if %2 {
      %cst_23 = arith.constant 0.000000e+00 : f32
      %42 = vector.broadcast %cst_23 : f32 to vector<8x1xf32>
      %c0_24 = arith.constant 0 : index
      %c0_25 = arith.constant 0 : index
      %43 = vector.load %arg8[%c0_24, %c0_25] : memref<8x1xf32, #tpu.memory_space<vmem>>, vector<8x1xf32>
      tpu.vector_store %arg8[%c0_24, %c0_25], %42 {strides = array<i32>} : memref<8x1xf32, #tpu.memory_space<vmem>>, vector<8x1xf32>,
      %cst_26 = arith.constant 1.000000e+00 : f32
      %44 = vector.broadcast %cst_26 : f32 to vector<8x1xf32>
      %c0_27 = arith.constant 0 : index
      %c0_28 = arith.constant 0 : index
      %45 = vector.load %arg9[%c0_27, %c0_28] : memref<8x1xf32, #tpu.memory_space<vmem>>, vector<8x1xf32>
      tpu.vector_store %arg9[%c0_27, %c0_28], %44 {strides = array<i32>} : memref<8x1xf32, #tpu.memory_space<vmem>>, vector<8x1xf32>,
    } else {
    }
    %c0 = arith.constant 0 : index
    %c0_1 = arith.constant 0 : index
    %3 = vector.load %arg2[%c0, %c0_1] : memref<8x32xf32, #tpu.memory_space<vmem>>, vector<8x32xf32>
    %c0_2 = arith.constant 0 : index
    %c0_3 = arith.constant 0 : index
    %4 = vector.load %arg5[%c0_2, %c0_3] : memref<128x32xf32, #tpu.memory_space<vmem>>, vector<128x32xf32>
    %cst = arith.constant dense<0.000000e+00> : vector<8x128xf32>
    %5 = tpu.matmul %3, %4, %cst {dimension_numbers = #tpu.dot_dimension_numbers<[1], [1], [0], [0], [0, 0, 1, 0], [], []>} : vector<8x32xf32>, vector<128x32xf32>, vector<8x128xf32> -> vector<8x128xf32>
    %c0_4 = arith.constant 0 : index
    %c0_5 = arith.constant 0 : index
    %6 = vector.load %arg3[%c0_4, %c0_5] : memref<8x1xf32, #tpu.memory_space<vmem>>, vector<8x1xf32>
    %7 = vector.broadcast %6 : vector<8x1xf32> to vector<8x128xf32>
    %8 = arith.mulf %5, %7 : vector<8x128xf32>
    %c0_6 = arith.constant 0 : index
    %c0_7 = arith.constant 0 : index
    %9 = vector.load %arg6[%c0_6, %c0_7] : memref<1x128xf32, #tpu.memory_space<vmem>>, vector<1x128xf32>
    %10 = vector.broadcast %9 : vector<1x128xf32> to vector<8x128xf32>
    %11 = arith.mulf %8, %10 : vector<8x128xf32>
    %c0_8 = arith.constant 0 : index
    %c0_9 = arith.constant 0 : index
    %12 = vector.load %arg4[%c0_8, %c0_9] : memref<8x1xf32, #tpu.memory_space<vmem>>, vector<8x1xf32>
    %13 = vector.broadcast %12 : vector<8x1xf32> to vector<8x128xf32>
    %14 = arith.subf %11, %13 : vector<8x128xf32>
    %c128_i32 = arith.constant 128 : i32
    %15 = arith.muli %arg1, %c128_i32 : i32
    %16 = tpu.iota {dimensions = array<i32: 1>} : vector<8x128xi32>
    %17 = vector.broadcast %15 : i32 to vector<8x128xi32>
    %18 = arith.addi %17, %16 : vector<8x128xi32>
    %c8_i32 = arith.constant 8 : i32
    %19 = vector.broadcast %c8_i32 : i32 to vector<8x128xi32>
    %20 = arith.cmpi slt, %18, %19 : vector<8x128xi32>
    %cst_10 = arith.constant 0xFF800000 : f32
    %21 = vector.broadcast %cst_10 : f32 to vector<8x128xf32>
    %22 = arith.select %20, %14, %21 : vector<8x128xi1>, vector<8x128xf32>
    %c0_11 = arith.constant 0 : index
    %c0_12 = arith.constant 0 : index
    %23 = vector.load %arg8[%c0_11, %c0_12] : memref<8x1xf32, #tpu.memory_space<vmem>>, vector<8x1xf32>
    %cst_13 = arith.constant dense<0xFF800000> : vector<8xf32>
    %24 = vector.multi_reduction <maximumf>, %22, %cst_13 [1] : vector<8x128xf32> to vector<8xf32>
    %25 = vector.shape_cast %24 : vector<8xf32> to vector<8x1xf32>
    %26 = arith.maximumf %23, %25 : vector<8x1xf32>
    %c0_14 = arith.constant 0 : index
    %c0_15 = arith.constant 0 : index
    %27 = vector.load %arg9[%c0_14, %c0_15] : memref<8x1xf32, #tpu.memory_space<vmem>>, vector<8x1xf32>
    %28 = arith.subf %23, %26 : vector<8x1xf32>
    %29 = math.exp %28 : vector<8x1xf32>
    %30 = arith.mulf %27, %29 : vector<8x1xf32>
    %31 = vector.broadcast %26 : vector<8x1xf32> to vector<8x128xf32>
    %32 = arith.subf %22, %31 : vector<8x128xf32>
    %33 = math.exp %32 : vector<8x128xf32>
    %cst_16 = arith.constant dense<0.000000e+00> : vector<8xf32>
    %34 = vector.multi_reduction <add>, %33, %cst_16 [1] : vector<8x128xf32> to vector<8xf32>
    %35 = vector.shape_cast %34 : vector<8xf32> to vector<8x1xf32>
    %36 = arith.addf %30, %35 : vector<8x1xf32>
    %c0_17 = arith.constant 0 : index
    %c0_18 = arith.constant 0 : index
    %37 = vector.load %arg9[%c0_17, %c0_18] : memref<8x1xf32, #tpu.memory_space<vmem>>, vector<8x1xf32>
    tpu.vector_store %arg9[%c0_17, %c0_18], %36 {strides = array<i32>} : memref<8x1xf32, #tpu.memory_space<vmem>>, vector<8x1xf32>,
    %c0_19 = arith.constant 0 : index
    %c0_20 = arith.constant 0 : index
    %38 = vector.load %arg8[%c0_19, %c0_20] : memref<8x1xf32, #tpu.memory_space<vmem>>, vector<8x1xf32>
    tpu.vector_store %arg8[%c0_19, %c0_20], %26 {strides = array<i32>} : memref<8x1xf32, #tpu.memory_space<vmem>>, vector<8x1xf32>,
    %c0_i32_21 = arith.constant 0 : i32
    %39 = arith.cmpi eq, %arg1, %c0_i32_21 : i32
    %40 = arith.extui %39 : i1 to i32
    %c0_i32_22 = arith.constant 0 : i32
    %41 = arith.cmpi ne, %40, %c0_i32_22 : i32
    scf.if %41 {
      %c0_23 = arith.constant 0 : index
      %c0_24 = arith.constant 0 : index
      %42 = vector.load %arg8[%c0_23, %c0_24] : memref<8x1xf32, #tpu.memory_space<vmem>>, vector<8x1xf32>
      %c0_25 = arith.constant 0 : index
      %c0_26 = arith.constant 0 : index
      %43 = vector.load %arg9[%c0_25, %c0_26] : memref<8x1xf32, #tpu.memory_space<vmem>>, vector<8x1xf32>
      %44 = math.log %43 : vector<8x1xf32>
      %45 = arith.addf %42, %44 : vector<8x1xf32>
      %c0_27 = arith.constant 0 : index
      %c0_28 = arith.constant 0 : index
      %46 = vector.load %arg7[%c0_27, %c0_28] : memref<8x1xf32, #tpu.memory_space<vmem>>, vector<8x1xf32>
      tpu.vector_store %arg7[%c0_27, %c0_28], %45 {strides = array<i32>} : memref<8x1xf32, #tpu.memory_space<vmem>>, vector<8x1xf32>,
    } else {
    }
    return
  }
  func.func @transform_0(%arg0: i32, %arg1: i32) -> (i32, i32) {
    %c0_i32 = arith.constant 0 : i32
    %c0_i32_0 = arith.constant 0 : i32
    return %arg0, %c0_i32 : i32, i32
  }
  func.func @transform_1(%arg0: i32, %arg1: i32) -> (i32, i32) {
    %c0_i32 = arith.constant 0 : i32
    %c0_i32_0 = arith.constant 0 : i32
    return %arg0, %c0_i32 : i32, i32
  }
  func.func @transform_2(%arg0: i32, %arg1: i32) -> (i32, i32) {
    %c0_i32 = arith.constant 0 : i32
    %c0_i32_0 = arith.constant 0 : i32
    return %arg0, %c0_i32 : i32, i32
  }
  func.func @transform_3(%arg0: i32, %arg1: i32) -> (i32, i32) {
    %c0_i32 = arith.constant 0 : i32
    %c0_i32_0 = arith.constant 0 : i32
    return %arg1, %c0_i32 : i32, i32
  }
  func.func @transform_4(%arg0: i32, %arg1: i32) -> (i32, i32) {
    %c0_i32 = arith.constant 0 : i32
    %c0_i32_0 = arith.constant 0 : i32
    return %c0_i32, %arg1 : i32, i32
  }
  func.func @transform_5(%arg0: i32, %arg1: i32) -> (i32, i32) {
    %c0_i32 = arith.constant 0 : i32
    %c0_i32_0 = arith.constant 0 : i32
    return %arg0, %c0_i32 : i32, i32
  }
}

</mosaic_0001>

<llo_original>
// kernel: tpu_custom_call.1
$region0: #{tpu_custom_call.1}
  #allocation0 [shape = 'u32[]', space=smem, size = 0x4, offset = 0x4, fixed_abs, tag = 'smem constant byte address 0x4 - core index']
  #allocation1 [shape = 'u32[72,128]{1,0:T(1,128)}', space=vmem, size = 0x9000, scoped, tag = 'internal scratch']
  #allocation2 [shape = 'f32[8,1]{1,0:T(8,128)}', space=vmem, size = 0x1000, scoped, tag = 'scratch operand']
  #allocation3 [shape = 'f32[8,1]{1,0:T(8,128)}', space=vmem, size = 0x1000, scoped, tag = 'scratch operand']
  %s0 = inlined_call_operand.vmem [shape: f32[8,32], index: 0, kind: input, shape index: {}]
  %s1 = inlined_call_operand.vmem [shape: f32[8,1], index: 1, kind: input, shape index: {}]
  %s2 = inlined_call_operand.vmem [shape: f32[8,1], index: 2, kind: input, shape index: {}]
  %s3 = inlined_call_operand.vmem [shape: f32[128,32], index: 3, kind: input, shape index: {}]
  %s4 = inlined_call_operand.vmem [shape: f32[1,128], index: 4, kind: input, shape index: {}]
  %s5 = inlined_call_operand.vmem [shape: f32[8,1], index: 5, kind: output, shape index: {}]
  %s6 = sld [smem:[#allocation0]]
  $region38: #{tpu_custom_call.1} parent=0
    _
  %s8 = ssub.s32 1, %s6
  %s9 = scalar_select 0, %s8, %s6
  // Predicated region
  $region2: #{tpu_custom_call.1} parent=0 // pred_check
    _
  $region3: #{tpu_custom_call.1} parent=0 // pred_check_branch
    %11 = sbr.rel (0) target = $region5
  $region4: #{tpu_custom_call.1} parent=0 // pred_region
    _
  $region5: #{tpu_custom_call.1} parent=0 // pred_fallthru
    _
  // Predicated region
  $region6: #{tpu_custom_call.1} parent=0 // pred_check
    _
  $region7: #{tpu_custom_call.1} parent=0 // pred_check_branch
    %13 = sbr.rel (0) target = $region9
  $region8: #{tpu_custom_call.1} parent=0 // pred_region
    _
  $region9: #{tpu_custom_call.1} parent=0 // pred_fallthru
    _
  // Predicated region
  $region10: #{tpu_custom_call.1} parent=0 // pred_check
    _
  $region11: #{tpu_custom_call.1} parent=0 // pred_check_branch
    %15 = sbr.rel (0) target = $region13
  $region12: #{tpu_custom_call.1} parent=0 // pred_region
    _
  $region13: #{tpu_custom_call.1} parent=0 // pred_fallthru
    _
  // Predicated region
  $region14: #{tpu_custom_call.1} parent=0 // pred_check
    _
  $region15: #{tpu_custom_call.1} parent=0 // pred_check_branch
    %17 = sbr.rel (0) target = $region17
  $region16: #{tpu_custom_call.1} parent=0 // pred_region
    _
  $region17: #{tpu_custom_call.1} parent=0 // pred_fallthru
    _
  // Predicated region
  $region18: #{tpu_custom_call.1} parent=0 // pred_check
    _
  $region19: #{tpu_custom_call.1} parent=0 // pred_check_branch
    %19 = sbr.rel (0) target = $region21
  $region20: #{tpu_custom_call.1} parent=0 // pred_region
    _
  $region21: #{tpu_custom_call.1} parent=0 // pred_fallthru
    _
  %p20 = scmp.eq.s32.totalorder 0, 0
  // Predicated region
  $region22: #{tpu_custom_call.1} parent=0 // pred_check
    %p21 = pneg %p20
  $region23: #{tpu_custom_call.1} parent=0 // pred_check_branch
    %23 = sbr.rel (%p21) target = $region25
  $region24: #{tpu_custom_call.1} parent=0 // pred_region
    %vm24 = vcmask 7168
    %25 = vst.msk [vmem:[#allocation2] sm:$0xff] %vm24, 0.0
    %26 = vst.msk [vmem:[#allocation3] sm:$0xff] %vm24, 1.0
  $region25: #{tpu_custom_call.1} parent=0 // pred_fallthru
    _
  %v27 = vld [vmem:[%s0] sm:$0xff]
  %v28 = vld [vmem:[%s3] sm:$0xff]
  %v29 = vld [vmem:[%s3 + $0x8] sm:$0xff]
  %v30 = vld [vmem:[%s3 + $0x10] sm:$0xff]
  %v31 = vld [vmem:[%s3 + $0x18] sm:$0xff]
  %v32 = vld [vmem:[%s3 + $0x20] sm:$0xff]
  %v33 = vld [vmem:[%s3 + $0x28] sm:$0xff]
  %v34 = vld [vmem:[%s3 + $0x30] sm:$0xff]
  %v35 = vld [vmem:[%s3 + $0x38] sm:$0xff]
  %v36 = vld [vmem:[%s3 + $0x40] sm:$0xff]
  %v37 = vld [vmem:[%s3 + $0x48] sm:$0xff]
  %v38 = vld [vmem:[%s3 + $0x50] sm:$0xff]
  %v39 = vld [vmem:[%s3 + $0x58] sm:$0xff]
  %v40 = vld [vmem:[%s3 + $0x60] sm:$0xff]
  %v41 = vld [vmem:[%s3 + $0x68] sm:$0xff]
  %v42 = vld [vmem:[%s3 + $0x70] sm:$0xff]
  %v43 = vld [vmem:[%s3 + $0x78] sm:$0xff]
  %vm44 = vcmask 261120
  %v46 = vsel %vm44, %v27, 0
  %v49 = vsel %vm44, %v28, 0
  %v52 = vsel %vm44, %v29, 0
  %v55 = vsel %vm44, %v30, 0
  %v58 = vsel %vm44, %v31, 0
  %v61 = vsel %vm44, %v32, 0
  %v64 = vsel %vm44, %v33, 0
  %v67 = vsel %vm44, %v34, 0
  %v70 = vsel %vm44, %v35, 0
  %v73 = vsel %vm44, %v36, 0
  %v76 = vsel %vm44, %v37, 0
  %v79 = vsel %vm44, %v38, 0
  %v82 = vsel %vm44, %v39, 0
  %v85 = vsel %vm44, %v40, 0
  %v88 = vsel %vm44, %v41, 0
  %v91 = vsel %vm44, %v42, 0
  %v94 = vsel %vm44, %v43, 0
  %96 = vmatpush.xpose.msra.mxu0 %v94
  %97 = vmatpush.xpose.msra.mxu0 %v91
  %98 = vmatpush.xpose.msra.mxu0 %v88
  %99 = vmatpush.xpose.msra.mxu0 %v85
  %100 = vmatpush.xpose.msra.mxu0 %v82
  %101 = vmatpush.xpose.msra.mxu0 %v79
  %102 = vmatpush.xpose.msra.mxu0 %v76
  %103 = vmatpush.xpose.msra.mxu0 %v73
  %104 = vmatpush.xpose.msra.mxu0 %v70
  %105 = vmatpush.xpose.msra.mxu0 %v67
  %106 = vmatpush.xpose.msra.mxu0 %v64
  %107 = vmatpush.xpose.msra.mxu0 %v61
  %108 = vmatpush.xpose.msra.mxu0 %v58
  %109 = vmatpush.xpose.msra.mxu0 %v55
  %110 = vmatpush.xpose.msra.mxu0 %v52
  %111 = vmatpush.xpose.msra.mxu0 %v49
  %112 = vmatmul.f32.gmra.mxu0 %v46
  %v113 = vpop.f32.mrf.mxu0
  %v114 = vadd.f32 0.0, %v113
  %115 = vdwg.mxu0
  %v116 = vld [vmem:[%s1] sm:$0xff]
  %118 = vset.pattern.permute.xlu0 0
  %119 = vperm.xlu0 %118, %v116
  %v120 = vpop.permute.xlu0 %119
  %v122 = vmul.f32 %v114, %v120
  %v123 = vld [vmem:[%s4] sm:$0x1]
  %v125 = vperm.slane %v123, 0
  %v127 = vmul.f32 %v122, %v125
  %v128 = vld [vmem:[%s2] sm:$0xff]
  %130 = vset.pattern.permute.xlu0 0
  %131 = vperm.xlu0 %130, %v128
  %v132 = vpop.permute.xlu0 %131
  %v134 = vsub.f32 %v127, %v132
  %s135 = smul.u32 0, 128
  %v136 = vlaneseq
  %v137 = vand.u32 %v136, 127
  %v138 = vstv %s135
  %v139 = vadd.s32 %v138, %v137
  %vm140 = vcmp.lt.s32.totalorder %v139, 8
  %v141 = vsel %vm140, %v134, -inf
  %v142 = vld [vmem:[#allocation2] sm:$0xff]
  %143 = vmax.xlane.f32.xlu0 %v141
  %v144 = vpop.xlane.xlu0 %143
  %v145 = vmax.f32 %v142, %v144
  %v146 = vld [vmem:[#allocation3] sm:$0xff]
  %v147 = vsub.f32 %v142, %v145
  %v148 = vmul.f32 %v147, 1.442695
  %v149 = vpow.pop %v148
  %v150 = vmul.f32 %v146, %v149
  %152 = vset.pattern.permute.xlu0 0
  %153 = vperm.xlu0 %152, %v145
  %v154 = vpop.permute.xlu0 %153
  %v156 = vsub.f32 %v141, %v154
  %v157 = vmul.f32 %v156, 1.442695
  %v158 = vpow.pop %v157
  %159 = vadd.xlane.f32.xlu0 %v158
  %v160 = vpop.xlane.xlu0 %159
  %v161 = vadd.f32 %v150, %v160
  %vm162 = vcmask 7168
  %163 = vst.msk [vmem:[#allocation3] sm:$0xff] %vm162, %v161
  %164 = vst.msk [vmem:[#allocation2] sm:$0xff] %vm162, %v145
  // Predicated region
  $region26: #{tpu_custom_call.1} parent=0 // pred_check
    %p165 = pneg %p20
  $region27: #{tpu_custom_call.1} parent=0 // pred_check_branch
    %167 = sbr.rel (%p165) target = $region29
  $region28: #{tpu_custom_call.1} parent=0 // pred_region
    %v168 = vld [vmem:[#allocation2] sm:$0xff]
    %v169 = vld [vmem:[#allocation3] sm:$0xff]
    %v170 = vlog2.pop %v169
    %v171 = vmul.f32 %v170, 0.6931472
    %v172 = vadd.f32 %v168, %v171
    %173 = vst.msk [vmem:[%s5] sm:$0xff] %vm162, %v172
  $region29: #{tpu_custom_call.1} parent=0 // pred_fallthru
    _
  // Predicated region
  $region30: #{tpu_custom_call.1} parent=0 // pred_check
    _
  $region31: #{tpu_custom_call.1} parent=0 // pred_check_branch
    %175 = sbr.rel (0) target = $region33
  $region32: #{tpu_custom_call.1} parent=0 // pred_region
    _
  $region33: #{tpu_custom_call.1} parent=0 // pred_fallthru
    _
  // Predicated region
  $region34: #{tpu_custom_call.1} parent=0 // pred_check
    _
  $region35: #{tpu_custom_call.1} parent=0 // pred_check_branch
    %177 = sbr.rel (0) target = $region37
  $region36: #{tpu_custom_call.1} parent=0 // pred_region
    _
  $region37: #{tpu_custom_call.1} parent=0 // pred_fallthru
    _

</llo_original>
